<compile_context>
chip_gen: v7x
topology: tpu7x:2x2x1
jax: 0.10.0
libtpu: 0.0.40
codegen_flags: <defaults>
</compile_context>

<pallas_src>
import functools
import math

import jax
import jax.numpy as jnp
from jax.experimental import pallas as pl
from jax.experimental.pallas import tpu as pltpu

_LANE = 128
_SUBLANE = 8
# Above this many bytes of layer weights, keep them single-buffered in VMEM
# (constant-index blocks do not need double buffering).
_SINGLE_BUFFER_WEIGHT_BYTES = 2 * 1024 * 1024


def _round_up(x, m):
    return ((x + m - 1) // m) * m


def _cdiv(a, b):
    return (a + b - 1) // b


def _vmem_capacity_bytes():
    try:
        return int(pltpu.get_tpu_info().vmem_capacity_bytes)
    except Exception:  # conservative (v7x-sized) fallback
        return 64 * 1024 * 1024


# ---------------------------------------------------------------------------
# Fused FFN: all layers in one pallas_call, grid over row tiles only.
# ---------------------------------------------------------------------------
def _ffn_fused_kernel(*refs, approximate):
    # refs = (x_ref, w0, b0, w1, b1, ..., o_ref)
    x_ref, layer_refs, o_ref = refs[0], refs[1:-1], refs[-1]
    h = x_ref[...].astype(jnp.bfloat16)          # bf16 operands -> native MXU
    num_layers = len(layer_refs) // 2
    for l in range(num_layers):
        w_ref = layer_refs[2 * l]
        b_ref = layer_refs[2 * l + 1]
        acc = jnp.dot(h, w_ref[...], preferred_element_type=jnp.float32)
        acc = acc + b_ref[...]                   # f32 bias on the f32 acc
        acc = jax.nn.gelu(acc, approximate=approximate)
        h = acc.astype(jnp.bfloat16) if l + 1 < num_layers else acc
    o_ref[...] = h.astype(o_ref.dtype)


def _ffn_fused(x2d, weights, biases, *, approximate, tm, vmem_limit):
    """x2d: (M, K0) -> (Mp, N_last_padded); caller slices to logical shape."""
    M, K0 = x2d.shape
    n_last = weights[-1].shape[1]                # padded, multiple of 128

    rows = _round_up(M, _SUBLANE)
    tm = min(tm, rows)
    # v7x megacore: make sure the (parallel) row axis has at least 2 tiles.
    if rows // tm < 2 and rows >= 2 * _SUBLANE:
        tm = _round_up(_cdiv(rows, 2), _SUBLANE)
    num_tiles = _cdiv(rows, tm)
    Mp = num_tiles * tm
    if Mp != M:
        x2d = jnp.pad(x2d, ((0, Mp - M), (0, 0)))

    weight_bytes = sum(w.size * w.dtype.itemsize for w in weights)
    single_buffer = weight_bytes > _SINGLE_BUFFER_WEIGHT_BYTES

    def _const_spec(shape):
        if single_buffer:
            # Constant-index weights don't need double buffering; halving
            # their VMEM footprint keeps larger stacks on the fused path.
            return pl.BlockSpec(shape, lambda i: (0, 0),
                                pipeline_mode=pl.Buffered(1))
        return pl.BlockSpec(shape, lambda i: (0, 0))

    in_specs = [pl.BlockSpec((tm, K0), lambda i: (i, 0))]
    args = [x2d]
    flops = 0
    transcendentals = 0
    bytes_accessed = Mp * K0 * x2d.dtype.itemsize
    k = K0
    for w, b in zip(weights, biases):
        n = w.shape[1]
        in_specs.append(_const_spec(w.shape))
        in_specs.append(_const_spec(b.shape))
        args.extend([w, b])
        flops += 2 * Mp * k * n
        transcendentals += Mp * n
        bytes_accessed += w.size * w.dtype.itemsize + b.size * b.dtype.itemsize
        k = n
    bytes_accessed += Mp * n_last * x2d.dtype.itemsize

    out = pl.pallas_call(
        functools.partial(_ffn_fused_kernel, approximate=approximate),
        out_shape=jax.ShapeDtypeStruct((Mp, n_last), x2d.dtype),
        grid_spec=pltpu.PrefetchScalarGridSpec(
            num_scalar_prefetch=0,
            grid=(num_tiles,),
            in_specs=in_specs,
            out_specs=pl.BlockSpec((tm, n_last), lambda i: (i, 0)),
        ),
        compiler_params=pltpu.CompilerParams(
            dimension_semantics=("parallel",),
            vmem_limit_bytes=int(vmem_limit),
        ),
        cost_estimate=pl.CostEstimate(
            flops=flops,
            transcendentals=transcendentals,
            bytes_accessed=bytes_accessed,
        ),
    )(*args)
    return out


# ---------------------------------------------------------------------------
# Per-layer tiled Linear + GELU (fallback when weights don't fit VMEM).
# ---------------------------------------------------------------------------
def _linear_gelu_kernel(x_ref, w_ref, b_ref, o_ref, acc_ref, *, approximate):
    @pl.when(pl.program_id(2) == 0)
    def _():
        acc_ref[...] = jnp.zeros_like(acc_ref)

    acc_ref[...] += jnp.dot(x_ref[...].astype(jnp.bfloat16), w_ref[...],
                            preferred_element_type=jnp.float32)

    @pl.when(pl.program_id(2) == pl.num_programs(2) - 1)
    def _():
        y = acc_ref[...] + b_ref[...]
        o_ref[...] = jax.nn.gelu(y, approximate=approximate).astype(o_ref.dtype)


def _linear_gelu(x2d, w, b2d, *, out_dtype, approximate, tm, tn, tk,
                 vmem_limit):
    """y = GELU(x2d @ w + b).  x2d: (M, K) float, w: (K, N) bf16,
    b2d: (1, N) f32.  Returns the full padded (Mp, Np) result."""
    M, K = x2d.shape
    N = w.shape[1]

    tm = min(tm, _round_up(M, _SUBLANE))
    tk = min(tk, _round_up(K, _LANE))
    tn = min(tn, _round_up(N, _LANE))
    Mp, Kp, Np = _round_up(M, tm), _round_up(K, tk), _round_up(N, tn)

    if (Mp, Kp) != (M, K):
        x2d = jnp.pad(x2d, ((0, Mp - M), (0, Kp - K)))
    if (Kp, Np) != (K, N):
        w = jnp.pad(w, ((0, Kp - K), (0, Np - N)))
    if Np != N:
        b2d = jnp.pad(b2d, ((0, 0), (0, Np - N)))

    out = pl.pallas_call(
        functools.partial(_linear_gelu_kernel, approximate=approximate),
        out_shape=jax.ShapeDtypeStruct((Mp, Np), out_dtype),
        grid_spec=pltpu.PrefetchScalarGridSpec(
            num_scalar_prefetch=0,
            grid=(Mp // tm, Np // tn, Kp // tk),
            in_specs=[
                pl.BlockSpec((tm, tk), lambda i, j, k: (i, k)),
                pl.BlockSpec((tk, tn), lambda i, j, k: (k, j)),
                pl.BlockSpec((1, tn), lambda i, j, k: (0, j)),
            ],
            out_specs=pl.BlockSpec((tm, tn), lambda i, j, k: (i, j)),
            scratch_shapes=[pltpu.VMEM((tm, tn), jnp.float32)],
        ),
        compiler_params=pltpu.CompilerParams(
            dimension_semantics=("parallel", "parallel", "arbitrary"),
            vmem_limit_bytes=int(vmem_limit),
        ),
        cost_estimate=pl.CostEstimate(
            flops=2 * Mp * Kp * Np,
            transcendentals=Mp * Np,
            bytes_accessed=(Mp * Kp * x2d.dtype.itemsize
                            + Kp * Np * w.dtype.itemsize
                            + Np * 4
                            + Mp * Np * jnp.dtype(out_dtype).itemsize),
        ),
    )(x2d, w, b2d)
    return out


# ---------------------------------------------------------------------------
# Forward driver (jit-ted with weights/biases as traced arguments).
# ---------------------------------------------------------------------------
def _fused_fits(x2d, weights, biases, *, tm, budget):
    K0 = x2d.shape[1]
    widths = [K0] + [w.shape[1] for w in weights]
    w_bytes = sum(w.size * w.dtype.itemsize for w in weights)
    b_bytes = sum(b.size * b.dtype.itemsize for b in biases)
    mult = 1 if w_bytes > _SINGLE_BUFFER_WEIGHT_BYTES else 2
    resident = mult * (w_bytes + b_bytes)
    act = 2 * tm * K0 * x2d.dtype.itemsize      # double-buffered input tiles
    act += 2 * tm * widths[-1] * 4              # double-buffered output tiles
    act += 2 * tm * max(widths) * 4             # live f32 intermediates
    return resident + act + (1 << 20) < budget


def _ffn_forward(x, weights, biases, *, out_features, approximate,
                 fused_tm, fb_tm, fb_tn, fb_tk, vmem_limit, fused_budget):
    lead = x.shape[:-1]
    x2d = x.reshape(-1, x.shape[-1])
    M = x2d.shape[0]

    if _fused_fits(x2d, weights, biases, tm=fused_tm, budget=fused_budget):
        out = _ffn_fused(x2d, weights, biases, approximate=approximate,
                         tm=fused_tm, vmem_limit=vmem_limit)
    else:
        out = x2d
        n_layers = len(weights)
        for i, (w, b) in enumerate(zip(weights, biases)):
            last = i == n_layers - 1
            out = _linear_gelu(
                out, w, b,
                out_dtype=(x.dtype if last else jnp.bfloat16),
                approximate=approximate,
                tm=fb_tm, tn=fb_tn, tk=fb_tk, vmem_limit=vmem_limit)

    out = out[:M, :out_features]
    return out.reshape(lead + (out_features,))


# ---------------------------------------------------------------------------
# Module wrapper
# ---------------------------------------------------------------------------
class FFNPallas:
    """JAX/Pallas equivalent of the PyTorch FFN module (eval-mode forward)."""

    def __init__(self, input_units, hidden_units, dropout_rate, key, *,
                 approximate_gelu=True):
        # Dropout is an identity in eval-mode forward.
        # TODO(synk): training-mode dropout (pltpu.prng_*) not implemented.
        self.dropout_rate = dropout_rate
        self.out_features = hidden_units[-1]

        weights, biases = [], []
        ref_weights, ref_biases = [], []
        in_logical = input_units
        in_padded = input_units          # layer-0 rows stay at the true width
        for units in hidden_units:
            key, wk, bk = jax.random.split(key, 3)
            # PyTorch Linear default init: U(-1/sqrt(fan_in), 1/sqrt(fan_in)).
            bound = 1.0 / math.sqrt(in_logical)
            w = jax.random.uniform(wk, (in_logical, units), jnp.float32,
                                   -bound, bound)
            b = jax.random.uniform(bk, (units,), jnp.float32, -bound, bound)
            ref_weights.append(w)
            ref_biases.append(b)
            # Zero-pad feature dims to multiples of 128 for lane-dense stores.
            # Exact: GELU(0) = 0 and zero-padded rows/cols contribute nothing.
            out_padded = _round_up(units, _LANE)
            wp = jnp.zeros((in_padded, out_padded), jnp.float32)
            wp = wp.at[:in_logical, :units].set(w)
            bp = jnp.zeros((1, out_padded), jnp.float32)
            bp = bp.at[0, :units].set(b)
            # bf16 weights feed the MXU at native rate; biases stay f32.
            weights.append(wp.astype(jnp.bfloat16))
            biases.append(bp)
            in_logical = units
            in_padded = out_padded
        self.weights = tuple(weights)
        self.biases = tuple(biases)
        # f32 / unpadded masters kept only for reference checks.
        self.ref_weights = tuple(ref_weights)
        self.ref_biases = tuple(ref_biases)

        # Generation-aware VMEM budgets (v5e/v6e: 128 MiB, v7x: 64 MiB phys).
        cap = _vmem_capacity_bytes()
        self.vmem_limit = int(min(cap * 3 // 4, 100 * 1024 * 1024))
        self.fused_budget = int(self.vmem_limit * 0.85)
        if cap >= 100 * 1024 * 1024:         # v5e / v6e
            fb_tm, fb_tn, fb_tk = 512, 1024, 1024
        else:                                # v7x
            fb_tm, fb_tn, fb_tk = 512, 512, 512

        # Weights/biases are runtime (traced) args; config is Python-static.
        self._forward = jax.jit(functools.partial(
            _ffn_forward,
            out_features=self.out_features,
            approximate=approximate_gelu,
            fused_tm=512,
            fb_tm=fb_tm, fb_tn=fb_tn, fb_tk=fb_tk,
            vmem_limit=self.vmem_limit,
            fused_budget=self.fused_budget,
        ))

    def __call__(self, x):
        return self._forward(x, self.weights, self.biases)


if __name__ == "__main__":
    key = jax.random.PRNGKey(0)
    key, xkey, pkey = jax.random.split(key, 3)

    batch, seq, input_units = 2, 8, 32
    hidden_units = [64, 32]
    dropout_rate = 0.1

    x = jax.random.normal(xkey, (batch, seq, input_units), jnp.float32)

    ffn = FFNPallas(input_units, hidden_units, dropout_rate, pkey)

    # Fused-path forward (all layers in one pallas_call).
    out = jax.block_until_ready(ffn(x))

    # Pure-JAX f32 reference of the same eval-mode forward; tolerance covers
    # the bf16-operand MXU path (accumulation stays in f32).
    ref = x.reshape(-1, input_units)
    for w, b in zip(ffn.ref_weights, ffn.ref_biases):
        ref = jax.nn.gelu(ref @ w + b, approximate=True)
    ref = ref.reshape(batch, seq, hidden_units[-1])

    assert out.shape == (batch, seq, hidden_units[-1]), out.shape
    assert jnp.allclose(out, ref, atol=3e-2, rtol=3e-2), float(
        jnp.max(jnp.abs(out - ref)))

    # Also exercise the per-layer tiled fallback path (padded weights, f32
    # accumulator, bf16 inter-layer activations) by forcing a zero budget.
    fallback = jax.jit(functools.partial(
        _ffn_forward,
        out_features=hidden_units[-1],
        approximate=True,
        fused_tm=512, fb_tm=256, fb_tn=512, fb_tk=512,
        vmem_limit=ffn.vmem_limit, fused_budget=0))
    out_fb = jax.block_until_ready(fallback(x, ffn.weights, ffn.biases))
    assert jnp.allclose(out_fb, ref, atol=3e-2, rtol=3e-2), float(
        jnp.max(jnp.abs(out_fb - ref)))

    print("KERNEL_OK")
</pallas_src>

<mosaic_0001>
module attributes {stable_mosaic.version = 11 : i64} {
  func.func @_ffn_fused_kernel(%arg0: i32, %arg1: memref<8x32xf32, #tpu.memory_space<vmem>>, %arg2: memref<32x128xbf16, #tpu.memory_space<vmem>>, %arg3: memref<1x128xf32, #tpu.memory_space<vmem>>, %arg4: memref<128x128xbf16, #tpu.memory_space<vmem>>, %arg5: memref<1x128xf32, #tpu.memory_space<vmem>>, %arg6: memref<8x128xf32, #tpu.memory_space<vmem>>) attributes {dimension_semantics = [#tpu.dimension_semantics<parallel>], iteration_bounds = array<i64: 2>, scalar_prefetch = 0 : i64, scratch_operands = 0 : i64, tpu.core_type = #tpu.core_type<tc>, window_params = [{transform_indices = @transform_0, window_bounds = array<i64: 8, 32>}, {pipeline_mode = #tpu.pipeline_mode<synchronous>, transform_indices = @transform_1, window_bounds = array<i64: 32, 128>}, {pipeline_mode = #tpu.pipeline_mode<synchronous>, transform_indices = @transform_2, window_bounds = array<i64: 1, 128>}, {pipeline_mode = #tpu.pipeline_mode<synchronous>, transform_indices = @transform_3, window_bounds = array<i64: 128, 128>}, {pipeline_mode = #tpu.pipeline_mode<synchronous>, transform_indices = @transform_4, window_bounds = array<i64: 1, 128>}, {transform_indices = @transform_5, window_bounds = array<i64: 8, 128>}]} {
    %c0 = arith.constant 0 : index
    %c0_0 = arith.constant 0 : index
    %0 = vector.load %arg1[%c0, %c0_0] : memref<8x32xf32, #tpu.memory_space<vmem>>, vector<8x32xf32>
    %1 = arith.truncf %0 : vector<8x32xf32> to vector<8x32xbf16>
    %c0_1 = arith.constant 0 : index
    %c0_2 = arith.constant 0 : index
    %2 = vector.load %arg2[%c0_1, %c0_2] : memref<32x128xbf16, #tpu.memory_space<vmem>>, vector<32x128xbf16>
    %cst = arith.constant dense<0.000000e+00> : vector<8x128xf32>
    %3 = tpu.matmul %1, %2, %cst {dimension_numbers = #tpu.dot_dimension_numbers<[1], [0], [0], [1], [0, 0, 1, 1], [], []>} : vector<8x32xbf16>, vector<32x128xbf16>, vector<8x128xf32> -> vector<8x128xf32>
    %c0_3 = arith.constant 0 : index
    %c0_4 = arith.constant 0 : index
    %4 = vector.load %arg3[%c0_3, %c0_4] : memref<1x128xf32, #tpu.memory_space<vmem>>, vector<1x128xf32>
    %5 = vector.broadcast %4 : vector<1x128xf32> to vector<8x128xf32>
    %6 = arith.addf %3, %5 : vector<8x128xf32>
    %7 = arith.mulf %6, %6 : vector<8x128xf32>
    %8 = arith.mulf %6, %7 : vector<8x128xf32>
    %cst_5 = arith.constant 4.471500e-02 : f32
    %9 = vector.broadcast %cst_5 : f32 to vector<8x128xf32>
    %10 = arith.mulf %9, %8 : vector<8x128xf32>
    %11 = arith.addf %6, %10 : vector<8x128xf32>
    %cst_6 = arith.constant 0.797884583 : f32
    %12 = vector.broadcast %cst_6 : f32 to vector<8x128xf32>
    %13 = arith.mulf %12, %11 : vector<8x128xf32>
    %14 = math.tanh %13 : vector<8x128xf32>
    %cst_7 = arith.constant 1.000000e+00 : f32
    %15 = vector.broadcast %cst_7 : f32 to vector<8x128xf32>
    %16 = arith.addf %15, %14 : vector<8x128xf32>
    %cst_8 = arith.constant 5.000000e-01 : f32
    %17 = vector.broadcast %cst_8 : f32 to vector<8x128xf32>
    %18 = arith.mulf %17, %16 : vector<8x128xf32>
    %19 = arith.mulf %6, %18 : vector<8x128xf32>
    %20 = arith.truncf %19 : vector<8x128xf32> to vector<8x128xbf16>
    %c0_9 = arith.constant 0 : index
    %c0_10 = arith.constant 0 : index
    %21 = vector.load %arg4[%c0_9, %c0_10] : memref<128x128xbf16, #tpu.memory_space<vmem>>, vector<128x128xbf16>
    %cst_11 = arith.constant dense<0.000000e+00> : vector<8x128xf32>
    %22 = tpu.matmul %20, %21, %cst_11 {dimension_numbers = #tpu.dot_dimension_numbers<[1], [0], [0], [1], [0, 0, 1, 1], [], []>} : vector<8x128xbf16>, vector<128x128xbf16>, vector<8x128xf32> -> vector<8x128xf32>
    %c0_12 = arith.constant 0 : index
    %c0_13 = arith.constant 0 : index
    %23 = vector.load %arg5[%c0_12, %c0_13] : memref<1x128xf32, #tpu.memory_space<vmem>>, vector<1x128xf32>
    %24 = vector.broadcast %23 : vector<1x128xf32> to vector<8x128xf32>
    %25 = arith.addf %22, %24 : vector<8x128xf32>
    %26 = arith.mulf %25, %25 : vector<8x128xf32>
    %27 = arith.mulf %25, %26 : vector<8x128xf32>
    %cst_14 = arith.constant 4.471500e-02 : f32
    %28 = vector.broadcast %cst_14 : f32 to vector<8x128xf32>
    %29 = arith.mulf %28, %27 : vector<8x128xf32>
    %30 = arith.addf %25, %29 : vector<8x128xf32>
    %cst_15 = arith.constant 0.797884583 : f32
    %31 = vector.broadcast %cst_15 : f32 to vector<8x128xf32>
    %32 = arith.mulf %31, %30 : vector<8x128xf32>
    %33 = math.tanh %32 : vector<8x128xf32>
    %cst_16 = arith.constant 1.000000e+00 : f32
    %34 = vector.broadcast %cst_16 : f32 to vector<8x128xf32>
    %35 = arith.addf %34, %33 : vector<8x128xf32>
    %cst_17 = arith.constant 5.000000e-01 : f32
    %36 = vector.broadcast %cst_17 : f32 to vector<8x128xf32>
    %37 = arith.mulf %36, %35 : vector<8x128xf32>
    %38 = arith.mulf %25, %37 : vector<8x128xf32>
    %c0_18 = arith.constant 0 : index
    %c0_19 = arith.constant 0 : index
    %39 = vector.load %arg6[%c0_18, %c0_19] : memref<8x128xf32, #tpu.memory_space<vmem>>, vector<8x128xf32>
    tpu.vector_store %arg6[%c0_18, %c0_19], %38 {strides = array<i32>} : memref<8x128xf32, #tpu.memory_space<vmem>>, vector<8x128xf32>,
    return
  }
  func.func @transform_0(%arg0: i32) -> (i32, i32) {
    %c0_i32 = arith.constant 0 : i32
    %c0_i32_0 = arith.constant 0 : i32
    return %arg0, %c0_i32 : i32, i32
  }
  func.func @transform_1(%arg0: i32) -> (i32, i32) {
    %c0_i32 = arith.constant 0 : i32
    %c0_i32_0 = arith.constant 0 : i32
    %c0_i32_1 = arith.constant 0 : i32
    return %c0_i32, %c0_i32_0 : i32, i32
  }
  func.func @transform_2(%arg0: i32) -> (i32, i32) {
    %c0_i32 = arith.constant 0 : i32
    %c0_i32_0 = arith.constant 0 : i32
    %c0_i32_1 = arith.constant 0 : i32
    return %c0_i32, %c0_i32_0 : i32, i32
  }
  func.func @transform_3(%arg0: i32) -> (i32, i32) {
    %c0_i32 = arith.constant 0 : i32
    %c0_i32_0 = arith.constant 0 : i32
    %c0_i32_1 = arith.constant 0 : i32
    return %c0_i32, %c0_i32_0 : i32, i32
  }
  func.func @transform_4(%arg0: i32) -> (i32, i32) {
    %c0_i32 = arith.constant 0 : i32
    %c0_i32_0 = arith.constant 0 : i32
    %c0_i32_1 = arith.constant 0 : i32
    return %c0_i32, %c0_i32_0 : i32, i32
  }
  func.func @transform_5(%arg0: i32) -> (i32, i32) {
    %c0_i32 = arith.constant 0 : i32
    %c0_i32_0 = arith.constant 0 : i32
    return %arg0, %c0_i32 : i32, i32
  }
}

</mosaic_0001>

<llo_original>
// kernel: _ffn_forward.1
$region0: #{_ffn_forward.1}
  #allocation0 [shape = 'u32[]', space=smem, size = 0x4, offset = 0x4, fixed_abs, tag = 'smem constant byte address 0x4 - core index']
  #allocation1 [shape = 'u32[144,128]{1,0:T(1,128)}', space=vmem, size = 0x12000, scoped, tag = 'internal scratch']
  %s0 = inlined_call_operand.hbm [shape: f32[16,32], index: 0, kind: input, shape index: {}]
  %s1 = inlined_call_operand.hbm [shape: bf16[32,128], index: 1, kind: input, shape index: {}]
  %s2 = inlined_call_operand.vmem [shape: f32[1,128], index: 2, kind: input, shape index: {}]
  %s3 = inlined_call_operand.hbm [shape: bf16[128,128], index: 3, kind: input, shape index: {}]
  %s4 = inlined_call_operand.vmem [shape: f32[1,128], index: 4, kind: input, shape index: {}]
  %s5 = inlined_call_operand.vmem [shape: f32[16,128], index: 5, kind: output, shape index: {}]
  %s6 = sld [smem:[#allocation0]]
  $region65: #{_ffn_forward.1} parent=0
    _
  %s8 = ssub.s32 1, %s6
  %s9 = scalar_select 0, %s8, %s6
  $region1: #{_ffn_forward.1} parent=0
    #allocation2 [shape = 'u8[8192]{0}', space=vmem, size = 0x2000, scoped, tag = 'input window, operand 0']
    #allocation3 [shape = 's32[2]{0}', space=sflag, size = 0x8, scoped, tag = 'scoped memory for _ffn_forward.1']
    #allocation4 [shape = 'u8[8192]{0}', space=vmem, size = 0x2000, scoped, tag = 'input window, operand 1, single buffered']
    #allocation5 [shape = 's32[1]{0}', space=sflag, size = 0x4, scoped, tag = 'scoped memory for _ffn_forward.1']
    #allocation6 [shape = 'u8[32768]{0}', space=vmem, size = 0x8000, scoped, tag = 'input window, operand 3, single buffered']
    %10 = vsyncpa [#allocation3], 0
    %s11 = scalar_lea.sflag [#allocation3], 1
    %12 = vsyncpa %s11, 0
    %13 = vsyncpa [#allocation5], 0
    loop: start=0, step=1, limit=4
    $region2: #{_ffn_forward.1} parent=1 // loop_pre_header
      _
    $region3: #{_ffn_forward.1} parent=1 // loop_header
      %s15 = sphi 0, %s19
      %p16 = scmp.ge.s32.totalorder %s15, 4
      %s25 = sphi 0, %s27
      %s28 = sphi 0, %s25
      %s29 = sphi 0, %s28
      %s45 = sphi 0, %s29
      %s49 = sphi 0, %s49
      %s51 = sphi 0, %s49
      %s52 = sphi 0, %s51
      %s66 = sphi 0, %s52
      %s70 = sphi 0, %s70
      %s72 = sphi 0, %s70
      %s73 = sphi 0, %s72
      %s87 = sphi 0, %s73
      %s91 = sphi 0, %s91
      %s93 = sphi 0, %s91
      %s94 = sphi 0, %s93
      %s108 = sphi 0, %s94
      %s112 = sphi 0, %s112
      %s114 = sphi 0, %s112
      %s115 = sphi 0, %s114
      %s129 = sphi 0, %s115
      %s135 = sphi 0, %s137
      %s138 = sphi 0, %s135
      %s139 = sphi 0, %s138
      %s155 = sphi 0, %s139
    $region4: #{_ffn_forward.1} parent=1 // loop_header_branch
      %18 = sbr.rel (%p16) target = $region8
    $region5: #{_ffn_forward.1} parent=1 // loop_body
      %s20 = ssub.s32 %s15, 1
      %s21 = ssub.s32 %s15, 2
      %s22 = sadd.s32 %s15, 1
      %s23 = ssub.s32 %s15, %s22
      %p24 = scmp.eq.s32.totalorder %s23, 0
      %s26 = sadd.s32 %s25, 1
      %s27 = scalar_select %p24, %s25, %s26
      %p30 = pneg %p24
      %p31 = scmp.eq.s32.totalorder %s15, 1
      %p32 = por %p30, %p31
      %p33 = scmp.ne.s32.totalorder %s25, %s28
      %p34 = scmp.eq.s32.totalorder %s15, 0
      %p35 = por %p33, %p34
      %p36 = scmp.ne.s32.totalorder %s25, %s28
      %p37 = scmp.eq.s32.totalorder %s20, 1
      %p38 = por %p36, %p37
      %p39 = scmp.ne.s32.totalorder %s28, %s29
      %p40 = scmp.eq.s32.totalorder %s20, 0
      %p41 = por %p39, %p40
      %p42 = scmp.ne.s32.totalorder %s28, %s29
      %p43 = scmp.eq.s32.totalorder %s21, 1
      %p44 = por %p42, %p43
      %p46 = scmp.ne.s32.totalorder %s29, %s45
      %p47 = scmp.eq.s32.totalorder %s21, 0
      %p48 = por %p46, %p47
      %s50 = sadd.s32 %s49, 1
      %p53 = scmp.eq.s32.totalorder %s15, 1
      %p54 = scmp.ne.s32.totalorder %s49, %s51
      %p55 = scmp.eq.s32.totalorder %s15, 0
      %p56 = por %p54, %p55
      %p57 = scmp.ne.s32.totalorder %s49, %s51
      %p58 = scmp.eq.s32.totalorder %s20, 1
      %p59 = por %p57, %p58
      %p60 = scmp.ne.s32.totalorder %s51, %s52
      %p61 = scmp.eq.s32.totalorder %s20, 0
      %p62 = por %p60, %p61
      %p63 = scmp.ne.s32.totalorder %s51, %s52
      %p64 = scmp.eq.s32.totalorder %s21, 1
      %p65 = por %p63, %p64
      %p67 = scmp.ne.s32.totalorder %s52, %s66
      %p68 = scmp.eq.s32.totalorder %s21, 0
      %p69 = por %p67, %p68
      %s71 = sadd.s32 %s70, 1
      %p74 = scmp.eq.s32.totalorder %s15, 1
      %p75 = scmp.ne.s32.totalorder %s70, %s72
      %p76 = scmp.eq.s32.totalorder %s15, 0
      %p77 = por %p75, %p76
      %p78 = scmp.ne.s32.totalorder %s70, %s72
      %p79 = scmp.eq.s32.totalorder %s20, 1
      %p80 = por %p78, %p79
      %p81 = scmp.ne.s32.totalorder %s72, %s73
      %p82 = scmp.eq.s32.totalorder %s20, 0
      %p83 = por %p81, %p82
      %p84 = scmp.ne.s32.totalorder %s72, %s73
      %p85 = scmp.eq.s32.totalorder %s21, 1
      %p86 = por %p84, %p85
      %p88 = scmp.ne.s32.totalorder %s73, %s87
      %p89 = scmp.eq.s32.totalorder %s21, 0
      %p90 = por %p88, %p89
      %s92 = sadd.s32 %s91, 1
      %p95 = scmp.eq.s32.totalorder %s15, 1
      %p96 = scmp.ne.s32.totalorder %s91, %s93
      %p97 = scmp.eq.s32.totalorder %s15, 0
      %p98 = por %p96, %p97
      %p99 = scmp.ne.s32.totalorder %s91, %s93
      %p100 = scmp.eq.s32.totalorder %s20, 1
      %p101 = por %p99, %p100
      %p102 = scmp.ne.s32.totalorder %s93, %s94
      %p103 = scmp.eq.s32.totalorder %s20, 0
      %p104 = por %p102, %p103
      %p105 = scmp.ne.s32.totalorder %s93, %s94
      %p106 = scmp.eq.s32.totalorder %s21, 1
      %p107 = por %p105, %p106
      %p109 = scmp.ne.s32.totalorder %s94, %s108
      %p110 = scmp.eq.s32.totalorder %s21, 0
      %p111 = por %p109, %p110
      %s113 = sadd.s32 %s112, 1
      %p116 = scmp.eq.s32.totalorder %s15, 1
      %p117 = scmp.ne.s32.totalorder %s112, %s114
      %p118 = scmp.eq.s32.totalorder %s15, 0
      %p119 = por %p117, %p118
      %p120 = scmp.ne.s32.totalorder %s112, %s114
      %p121 = scmp.eq.s32.totalorder %s20, 1
      %p122 = por %p120, %p121
      %p123 = scmp.ne.s32.totalorder %s114, %s115
      %p124 = scmp.eq.s32.totalorder %s20, 0
      %p125 = por %p123, %p124
      %p126 = scmp.ne.s32.totalorder %s114, %s115
      %p127 = scmp.eq.s32.totalorder %s21, 1
      %p128 = por %p126, %p127
      %p130 = scmp.ne.s32.totalorder %s115, %s129
      %p131 = scmp.eq.s32.totalorder %s21, 0
      %p132 = por %p130, %p131
      %s133 = ssub.s32 %s15, %s22
      %p134 = scmp.eq.s32.totalorder %s133, 0
      %s136 = sadd.s32 %s135, 1
      %s137 = scalar_select %p134, %s135, %s136
      %p140 = pneg %p134
      %p141 = scmp.eq.s32.totalorder %s15, 1
      %p142 = por %p140, %p141
      %p143 = scmp.ne.s32.totalorder %s135, %s138
      %p144 = scmp.eq.s32.totalorder %s15, 0
      %p145 = por %p143, %p144
      %p146 = scmp.ne.s32.totalorder %s135, %s138
      %p147 = scmp.eq.s32.totalorder %s20, 1
      %p148 = por %p146, %p147
      %p149 = scmp.ne.s32.totalorder %s138, %s139
      %p150 = scmp.eq.s32.totalorder %s20, 0
      %p151 = por %p149, %p150
      %p152 = scmp.ne.s32.totalorder %s138, %s139
      %p153 = scmp.eq.s32.totalorder %s21, 1
      %p154 = por %p152, %p153
      %p156 = scmp.ne.s32.totalorder %s139, %s155
      %p157 = scmp.eq.s32.totalorder %s21, 0
      %p158 = por %p156, %p157
      %p159 = scmp.le.s32.totalorder 1, %s15
      %p160 = scmp.lt.s32.totalorder %s15, 3
      %p161 = pnand %p159, %p160
      %p162 = pneg %p161
      // Predicated region
      $region9: #{_ffn_forward.1} parent=5 // pred_check
        _
      $region10: #{_ffn_forward.1} parent=5 // pred_check_branch
        %164 = sbr.rel (%p161) target = $region12
      $region11: #{_ffn_forward.1} parent=5 // pred_region
        %s165 = ssub.s32 %s15, 1
        // Predicated region
        $region13: #{_ffn_forward.1} parent=11 // pred_check
          %p166 = pneg %p62
        $region14: #{_ffn_forward.1} parent=11 // pred_check_branch
          %168 = sbr.rel (%p166) target = $region16
        $region15: #{_ffn_forward.1} parent=11 // pred_region
          %s170 = ssub.s32 256, 256
          %171 = vsyncadd [#allocation5], %s170
          %s172 = sshll.u32 [#allocation4], 4
          %s173 = int_to_ptr.vmem [resolvable:$true] %s172
          %178 = dma.hbm_to_vmem [thread:$0]  %s1, 256, %s173, [#allocation5], 64, 64, 4
        $region16: #{_ffn_forward.1} parent=11 // pred_fallthru
          _
        // Predicated region
        $region17: #{_ffn_forward.1} parent=11 // pred_check
          %p179 = pneg %p83
        $region18: #{_ffn_forward.1} parent=11 // pred_check_branch
          %181 = sbr.rel (%p179) target = $region20
        $region19: #{_ffn_forward.1} parent=11 // pred_region
          _
        $region20: #{_ffn_forward.1} parent=11 // pred_fallthru
          _
        // Predicated region
        $region21: #{_ffn_forward.1} parent=11 // pred_check
          %p182 = pneg %p104
        $region22: #{_ffn_forward.1} parent=11 // pred_check_branch
          %184 = sbr.rel (%p182) target = $region24
        $region23: #{_ffn_forward.1} parent=11 // pred_region
          %s186 = ssub.s32 1024, 1024
          %187 = vsyncadd [#allocation5], %s186
          %s188 = sshll.u32 [#allocation6], 4
          %s189 = int_to_ptr.vmem [resolvable:$true] %s188
          %194 = dma.hbm_to_vmem [thread:$0]  %s3, 1024, %s189, [#allocation5], 64, 64, 4
        $region24: #{_ffn_forward.1} parent=11 // pred_fallthru
          _
        // Predicated region
        $region25: #{_ffn_forward.1} parent=11 // pred_check
          %p195 = pneg %p125
        $region26: #{_ffn_forward.1} parent=11 // pred_check_branch
          %197 = sbr.rel (%p195) target = $region28
        $region27: #{_ffn_forward.1} parent=11 // pred_region
          _
        $region28: #{_ffn_forward.1} parent=11 // pred_fallthru
          _
      $region12: #{_ffn_forward.1} parent=5 // pred_fallthru
        _
      %p198 = scmp.lt.s32.totalorder %s15, 2
      // Predicated region
      $region29: #{_ffn_forward.1} parent=5 // pred_check
        %p199 = pneg %p198
      $region30: #{_ffn_forward.1} parent=5 // pred_check_branch
        %201 = sbr.rel (%p199) target = $region32
      $region31: #{_ffn_forward.1} parent=5 // pred_region
        // Predicated region
        $region33: #{_ffn_forward.1} parent=31 // pred_check
          %p202 = pneg %p35
        $region34: #{_ffn_forward.1} parent=31 // pred_check_branch
          %204 = sbr.rel (%p202) target = $region36
        $region35: #{_ffn_forward.1} parent=31 // pred_region
          %s205 = sand.u32 %s25, 1
          %s206 = scalar_lea.sflag [#allocation3], %s205
          %s207 = sand.u32 %s25, 1
          %s208 = smul.addr %s207, 8
          %s209 = scalar_lea.vmem [#allocation2], %s208
          %s211 = ssub.s32 128, 128
          %212 = vsyncadd %s206, %s211
          %s213 = smul.addr %s15, 128
          %s214 = scalar_lea.hbm %s0, %s213
          %s216 = sshll.u32 %s209, 4
          %s217 = int_to_ptr.vmem [resolvable:$true] %s216
          %219 = dma.hbm_to_vmem [thread:$0]  %s214, 128, %s217, %s206
        $region36: #{_ffn_forward.1} parent=31 // pred_fallthru
          _
      $region32: #{_ffn_forward.1} parent=5 // pred_fallthru
        _
      %p220 = scmp.le.s32.totalorder 1, %s15
      %p221 = scmp.lt.s32.totalorder %s15, 3
      %p222 = pnand %p220, %p221
      %p223 = pneg %p222
      // Predicated region
      $region37: #{_ffn_forward.1} parent=5 // pred_check
        _
      $region38: #{_ffn_forward.1} parent=5 // pred_check_branch
        %225 = sbr.rel (%p222) target = $region40
      $region39: #{_ffn_forward.1} parent=5 // pred_region
        %s226 = ssub.s32 %s15, 1
        %s227 = sand.u32 %s28, 1
        %s228 = scalar_lea.sflag [#allocation3], %s227
        %s229 = sand.u32 %s28, 1
        %s230 = smul.addr %s229, 8
        %s231 = scalar_lea.vmem [#allocation2], %s230
        // Predicated region
        $region41: #{_ffn_forward.1} parent=39 // pred_check
          %p232 = pneg %p41
        $region42: #{_ffn_forward.1} parent=39 // pred_check_branch
          %234 = sbr.rel (%p232) target = $region44
        $region43: #{_ffn_forward.1} parent=39 // pred_region
          %235 = dma.done %s228, 128
        $region44: #{_ffn_forward.1} parent=39 // pred_fallthru
          _
        // Predicated region
        $region45: #{_ffn_forward.1} parent=39 // pred_check
          %p236 = pneg %p62
        $region46: #{_ffn_forward.1} parent=39 // pred_check_branch
          %238 = sbr.rel (%p236) target = $region48
        $region47: #{_ffn_forward.1} parent=39 // pred_region
          %239 = dma.done [#allocation5], 256
        $region48: #{_ffn_forward.1} parent=39 // pred_fallthru
          _
        // Predicated region
        $region49: #{_ffn_forward.1} parent=39 // pred_check
          %p240 = pneg %p104
        $region50: #{_ffn_forward.1} parent=39 // pred_check_branch
          %242 = sbr.rel (%p240) target = $region52
        $region51: #{_ffn_forward.1} parent=39 // pred_region
          %243 = dma.done [#allocation5], 1024
        $region52: #{_ffn_forward.1} parent=39 // pred_fallthru
          _
        %s244 = sand.u32 %s28, 1
        %s245 = scalar_lea.sflag [#allocation3], %s244
        %s246 = sand.u32 %s28, 1
        %s247 = smul.addr %s246, 8
        %s248 = scalar_lea.vmem [#allocation2], %s247
        %p249 = pneg %p41
        %p250 = pneg %p38
        %p251 = pneg %p62
        %p252 = pneg %p59
        %p253 = pneg %p83
        %p254 = pneg %p80
        %p255 = pneg %p104
        %p256 = pneg %p101
        %p257 = pneg %p125
        %p258 = pneg %p122
        %p259 = pneg %p151
        %p260 = pneg %p148
        %p261 = scmp.lt.s32.totalorder %s20, 1
        %s262 = scalar_select %p261, %s20, 1
        %s263 = smul.addr %s262, 8
        %s264 = scalar_lea.vmem %s5, %s263
        %p265 = scmp.lt.s32.totalorder %s20, 1
        %s266 = scalar_select %p265, %s20, 1
        %s267 = smul.addr %s266, 8
        %s268 = scalar_lea.vmem %s5, %s267
        %v270 = vld [vmem:[%s231] sm:$0xff]
        %v271 = vpack.c.bf16 %v270, %v270
        %v272 = vld [vmem:[#allocation4] sm:$0xf]
        %v273 = vld [vmem:[#allocation4 + $0x4] sm:$0xf]
        %v274 = vld [vmem:[#allocation4 + $0x8] sm:$0xf]
        %v275 = vld [vmem:[#allocation4 + $0xc] sm:$0xf]
        %v276 = vld [vmem:[%s2] sm:$0x1]
        %v278 = vlaneseq
        %v279 = vshrl.u32 %v278, 7
        %v280 = vsub.s32 0, %v279
        %v281 = vrot.slane %v276, %v280
        %v287 = vunpack.c.l.b16 %v272
        %v288 = vunpack.c.l.b16 %v273
        %v289 = vunpack.c.l.b16 %v274
        %v290 = vunpack.c.l.b16 %v275
        %v291 = vpack.c.b16 %v288, %v287
        %v292 = vpack.c.b16 %v290, %v289
        %vm295 = vcmask 261120
        %v297 = vsel %vm295, %v271, 0
        %299 = vmatprep.subr.bf16.mxu0 0
        %300 = vmatpush1.bf16.msra.mxu0 %v291
        %301 = vmatprep.subr.bf16.mxu0 0
        %302 = vmatpush1.bf16.msra.mxu0 %v292
        %303 = vmatprep.subr.bf16.mxu0 0
        %304 = vmatpush1.bf16.msra.mxu0 0
        %305 = vmatprep.subr.bf16.mxu0 0
        %306 = vmatpush1.bf16.msra.mxu0 0
        %307 = vmatprep.subr.bf16.mxu0 0
        %308 = vmatpush1.bf16.msra.mxu0 0
        %309 = vmatprep.subr.bf16.mxu0 0
        %310 = vmatpush1.bf16.msra.mxu0 0
        %311 = vmatprep.subr.bf16.mxu0 0
        %312 = vmatpush1.bf16.msra.mxu0 0
        %313 = vmatprep.subr.bf16.mxu0 0
        %314 = vmatpush1.bf16.msra.mxu0 0
        %315 = vmatprep.subr.bf16.mxu0 0
        %316 = vmatpush1.bf16.msra.mxu0 0
        %317 = vmatprep.subr.bf16.mxu0 0
        %318 = vmatpush1.bf16.msra.mxu0 0
        %319 = vmatprep.subr.bf16.mxu0 0
        %320 = vmatpush1.bf16.msra.mxu0 0
        %321 = vmatprep.subr.bf16.mxu0 0
        %322 = vmatpush1.bf16.msra.mxu0 0
        %323 = vmatprep.subr.bf16.mxu0 0
        %324 = vmatpush1.bf16.msra.mxu0 0
        %325 = vmatprep.subr.bf16.mxu0 0
        %326 = vmatpush1.bf16.msra.mxu0 0
        %327 = vmatprep.subr.bf16.mxu0 0
        %328 = vmatpush1.bf16.msra.mxu0 0
        %329 = vmatprep.subr.bf16.mxu0 0
        %330 = vmatpush1.bf16.msra.mxu0 0
        %331 = vmatprep.mubr.bf16.mxu0 0
        %332 = vmatmul.mubr.bf16.gmra.mrb[0].mxu0 %v297
        %v333 = vpop.f32.mrb[0].mxu0
        %v334 = vadd.f32 %v281, %v333
        %v335 = vpop.f32.mrb[0].mxu0
        %v336 = vpop.f32.mrb[0].mxu0
        %v337 = vpop.f32.mrb[0].mxu0
        %338 = vdwg.mxu0
        %v339 = vmul.f32 %v334, %v334
        %v340 = vmul.f32 %v334, %v339
        %v341 = vmul.f32 %v340, 0.044715
        %v342 = vadd.f32 %v334, %v341
        %v343 = vmul.f32 %v342, 0.7978846
        %v344 = vtanh.pop %v343
        %v345 = vadd.f32 %v344, 1.0
        %v346 = vmul.f32 %v345, 0.5
        %v347 = vmul.f32 %v334, %v346
        %v348 = vpack.c.bf16 %v347, %v347
        %v349 = vld [vmem:[#allocation6] sm:$0xf]
        %v350 = vld [vmem:[#allocation6 + $0x4] sm:$0xf]
        %v351 = vld [vmem:[#allocation6 + $0x8] sm:$0xf]
        %v352 = vld [vmem:[#allocation6 + $0xc] sm:$0xf]
        %v353 = vld [vmem:[#allocation6 + $0x10] sm:$0xf]
        %v354 = vld [vmem:[#allocation6 + $0x14] sm:$0xf]
        %v355 = vld [vmem:[#allocation6 + $0x18] sm:$0xf]
        %v356 = vld [vmem:[#allocation6 + $0x1c] sm:$0xf]
        %v357 = vld [vmem:[#allocation6 + $0x20] sm:$0xf]
        %v358 = vld [vmem:[#allocation6 + $0x24] sm:$0xf]
        %v359 = vld [vmem:[#allocation6 + $0x28] sm:$0xf]
        %v360 = vld [vmem:[#allocation6 + $0x2c] sm:$0xf]
        %v361 = vld [vmem:[#allocation6 + $0x30] sm:$0xf]
        %v362 = vld [vmem:[#allocation6 + $0x34] sm:$0xf]
        %v363 = vld [vmem:[#allocation6 + $0x38] sm:$0xf]
        %v364 = vld [vmem:[#allocation6 + $0x3c] sm:$0xf]
        %v365 = vld [vmem:[%s4] sm:$0x1]
        %v367 = vlaneseq
        %v368 = vshrl.u32 %v367, 7
        %v369 = vsub.s32 0, %v368
        %v370 = vrot.slane %v365, %v369
        %v388 = vunpack.c.l.b16 %v349
        %v389 = vunpack.c.l.b16 %v350
        %v390 = vunpack.c.l.b16 %v351
        %v391 = vunpack.c.l.b16 %v352
        %v392 = vunpack.c.l.b16 %v353
        %v393 = vunpack.c.l.b16 %v354
        %v394 = vunpack.c.l.b16 %v355
        %v395 = vunpack.c.l.b16 %v356
        %v396 = vunpack.c.l.b16 %v357
        %v397 = vunpack.c.l.b16 %v358
        %v398 = vunpack.c.l.b16 %v359
        %v399 = vunpack.c.l.b16 %v360
        %v400 = vunpack.c.l.b16 %v361
        %v401 = vunpack.c.l.b16 %v362
        %v402 = vunpack.c.l.b16 %v363
        %v403 = vunpack.c.l.b16 %v364
        %v404 = vpack.c.b16 %v389, %v388
        %v405 = vpack.c.b16 %v391, %v390
        %v406 = vpack.c.b16 %v393, %v392
        %v407 = vpack.c.b16 %v395, %v394
        %v408 = vpack.c.b16 %v397, %v396
        %v409 = vpack.c.b16 %v399, %v398
        %v410 = vpack.c.b16 %v401, %v400
        %v411 = vpack.c.b16 %v403, %v402
        %420 = vmatprep.subr.bf16.mxu0 0
        %421 = vmatpush1.bf16.msra.mxu0 %v404
        %422 = vmatprep.subr.bf16.mxu0 0
        %423 = vmatpush1.bf16.msra.mxu0 %v405
        %424 = vmatprep.subr.bf16.mxu0 0
        %425 = vmatpush1.bf16.msra.mxu0 %v406
        %426 = vmatprep.subr.bf16.mxu0 0
        %427 = vmatpush1.bf16.msra.mxu0 %v407
        %428 = vmatprep.subr.bf16.mxu0 0
        %429 = vmatpush1.bf16.msra.mxu0 %v408
        %430 = vmatprep.subr.bf16.mxu0 0
        %431 = vmatpush1.bf16.msra.mxu0 %v409
        %432 = vmatprep.subr.bf16.mxu0 0
        %433 = vmatpush1.bf16.msra.mxu0 %v410
        %434 = vmatprep.subr.bf16.mxu0 0
        %435 = vmatpush1.bf16.msra.mxu0 %v411
        %436 = vmatprep.subr.bf16.mxu0 0
        %437 = vmatpush1.bf16.msra.mxu0 0
        %438 = vmatprep.subr.bf16.mxu0 0
        %439 = vmatpush1.bf16.msra.mxu0 0
        %440 = vmatprep.subr.bf16.mxu0 0
        %441 = vmatpush1.bf16.msra.mxu0 0
        %442 = vmatprep.subr.bf16.mxu0 0
        %443 = vmatpush1.bf16.msra.mxu0 0
        %444 = vmatprep.subr.bf16.mxu0 0
        %445 = vmatpush1.bf16.msra.mxu0 0
        %446 = vmatprep.subr.bf16.mxu0 0
        %447 = vmatpush1.bf16.msra.mxu0 0
        %448 = vmatprep.subr.bf16.mxu0 0
        %449 = vmatpush1.bf16.msra.mxu0 0
        %450 = vmatprep.subr.bf16.mxu0 0
        %451 = vmatpush1.bf16.msra.mxu0 0
        %452 = vmatprep.mubr.bf16.mxu0 0
        %453 = vmatmul.mubr.bf16.gmra.mrb[0].mxu0 %v348
        %v454 = vpop.f32.mrb[0].mxu0
        %v455 = vadd.f32 %v370, %v454
        %v456 = vpop.f32.mrb[0].mxu0
        %v457 = vpop.f32.mrb[0].mxu0
        %v458 = vpop.f32.mrb[0].mxu0
        %459 = vdwg.mxu0
        %v460 = vmul.f32 %v455, %v455
        %v461 = vmul.f32 %v455, %v460
        %v462 = vmul.f32 %v461, 0.044715
        %v463 = vadd.f32 %v455, %v462
        %v464 = vmul.f32 %v463, 0.7978846
        %v465 = vtanh.pop %v464
        %v466 = vadd.f32 %v465, 1.0
        %v467 = vmul.f32 %v466, 0.5
        %v468 = vmul.f32 %v455, %v467
        %469 = vst [vmem:[%s268] sm:$0xff] %v468
        %p470 = scmp.lt.s32.totalorder %s20, 1
        %s471 = scalar_select %p470, %s20, 1
        %s472 = smul.addr %s471, 8
        %s473 = scalar_lea.vmem %s5, %s472
        // Predicated region
        $region53: #{_ffn_forward.1} parent=39 // pred_check
          %p474 = pneg %p148
        $region54: #{_ffn_forward.1} parent=39 // pred_check_branch
          %476 = sbr.rel (%p474) target = $region56
        $region55: #{_ffn_forward.1} parent=39 // pred_region
          _
        $region56: #{_ffn_forward.1} parent=39 // pred_fallthru
          _
      $region40: #{_ffn_forward.1} parent=5 // pred_fallthru
        _
      %p477 = scmp.le.s32.totalorder 2, %s15
      // Predicated region
      $region57: #{_ffn_forward.1} parent=5 // pred_check
        %p478 = pneg %p477
      $region58: #{_ffn_forward.1} parent=5 // pred_check_branch
        %480 = sbr.rel (%p478) target = $region60
      $region59: #{_ffn_forward.1} parent=5 // pred_region
        %s481 = ssub.s32 %s15, 2
        // Predicated region
        $region61: #{_ffn_forward.1} parent=59 // pred_check
          %p482 = pneg %p154
        $region62: #{_ffn_forward.1} parent=59 // pred_check_branch
          %484 = sbr.rel (%p482) target = $region64
        $region63: #{_ffn_forward.1} parent=59 // pred_region
          %p485 = scmp.lt.s32.totalorder %s21, 1
          %s486 = scalar_select %p485, %s21, 1
          %s487 = smul.addr %s486, 8
          %s488 = scalar_lea.vmem %s5, %s487
        $region64: #{_ffn_forward.1} parent=59 // pred_fallthru
          _
      $region60: #{_ffn_forward.1} parent=5 // pred_fallthru
        _
    $region6: #{_ffn_forward.1} parent=1 // loop_footer
      %s19 = sadd.s32 1, %s15
    $region7: #{_ffn_forward.1} parent=1 // loop_footer_branch
      %14 = sbr.rel target = $region3
    $region8: #{_ffn_forward.1} parent=1 // loop_exit
      _
    %489 = vsyncpa [#allocation3], 1
    %s490 = scalar_lea.sflag [#allocation3], 1
    %491 = vsyncpa %s490, 1
    %492 = vsyncpa [#allocation5], 1

</llo_original>
